<compile_context>
chip_gen: v7x
topology: tpu7x:2x2x1
jax: 0.10.0
libtpu: 0.0.40
codegen_flags: <defaults>
</compile_context>

<pallas_src>
import functools
import math

import jax
import jax.numpy as jnp
from jax.experimental import pallas as pl
from jax.experimental.pallas import tpu as pltpu

MIN_SEQ_LEN = 5


# ---------------------------------------------------------------------------
# Kernel 1: QKV projections (kq_same=True -> K uses the Q projection).
# ---------------------------------------------------------------------------
def _proj_kernel(q_ref, k_ref, v_ref, wq_ref, bq_ref, wv_ref, bv_ref,
                 qh_ref, kh_ref, vh_ref, *, n_heads):
    f32 = jnp.float32
    bf16 = jnp.bfloat16
    D = q_ref.shape[2]
    dh = D // n_heads

    wq = wq_ref[...].astype(bf16)
    wv = wv_ref[...].astype(bf16)
    bq = bq_ref[...]                     # (1, D) f32
    bv = bv_ref[...]

    # bf16 MXU operands, f32 accumulation; bias add stays in f32.
    qp = jnp.dot(q_ref[0].astype(bf16), wq, preferred_element_type=f32) + bq
    kp = jnp.dot(k_ref[0].astype(bf16), wq, preferred_element_type=f32) + bq
    vp = jnp.dot(v_ref[0].astype(bf16), wv, preferred_element_type=f32) + bv

    for hh in range(n_heads):            # static loop; head-major bf16 writeout
        sl = slice(hh * dh, (hh + 1) * dh)
        qh_ref[0, hh] = qp[:, sl].astype(bf16)
        kh_ref[0, hh] = kp[:, sl].astype(bf16)
        vh_ref[0, hh] = vp[:, sl].astype(bf16)


# ---------------------------------------------------------------------------
# Kernel 2: per-(batch, head) attention + fused out_linear / residual / LN.
# ---------------------------------------------------------------------------
def _attn_kernel(qh_ref, kh_ref, vh_ref, tail_ref, gam_ref,
                 qin_ref, wo_ref, bo_ref, lng_ref, lnb_ref,
                 out_ref, sc_ref, acc_ref, *, peek_cur):
    f32 = jnp.float32
    bf16 = jnp.bfloat16
    h = pl.program_id(1)
    S = qh_ref.shape[2]
    dh = qh_ref.shape[3]

    @pl.when(h == 0)
    def _():
        acc_ref[...] = jnp.zeros_like(acc_ref)

    qh = qh_ref[0, 0]                    # (S, dh) bf16
    kh = kh_ref[0, 0]
    vh = vh_ref[0, 0]

    inv_sqrt_dk = jnp.float32(1.0 / math.sqrt(dh))
    # qh @ kh.T on the MXU (contraction on dh), f32 accumulation.
    scores = jax.lax.dot_general(
        qh, kh, (((1,), (1,)), ((), ())),
        preferred_element_type=f32) * inv_sqrt_dk        # (S, S) f32

    row = jax.lax.broadcasted_iota(jnp.int32, (S, S), 0)
    col = jax.lax.broadcasted_iota(jnp.int32, (S, S), 1)
    mask = (col <= row) if peek_cur else (col < row)     # tril(0) / tril(-1)
    pos_eff = jnp.abs(col - row).astype(f32)

    neg = jnp.float32(-1e32)

    # ---- gamma distance decay (torch no_grad block) ----
    sm = jnp.where(mask, scores, neg)
    m = jnp.max(sm, axis=-1, keepdims=True)
    e = jnp.exp(sm - m)
    p = e * pl.reciprocal(jnp.sum(e, axis=-1, keepdims=True), approx=True)
    # (disttotal - distcum)[i, j] = sum_{j' > j} p[i, j']  == p @ U_strict
    tail = jnp.dot(p.astype(bf16), tail_ref[...], preferred_element_type=f32)
    dist = jnp.sqrt(jnp.maximum(tail * pos_eff, 0.0))
    gamma_h = gam_ref[h]                                 # scalar (-|gamma|) from SMEM
    total_effect = jnp.clip(jnp.exp(dist * gamma_h), 1e-5, 1e5)
    scores = scores * total_effect

    # ---- masked softmax ----
    sm2 = jnp.where(mask, scores, neg)
    m2 = jnp.max(sm2, axis=-1, keepdims=True)
    e2 = jnp.exp(sm2 - m2)
    p2 = e2 * pl.reciprocal(jnp.sum(e2, axis=-1, keepdims=True), approx=True)
    p2 = jnp.where(mask, p2, 0.0)

    if not peek_cur:                                     # maxout rescale
        mx = jnp.max(p2, axis=-1, keepdims=True)
        # exact divide on purpose: fully-masked row relies on 1/0 -> inf -> 5.
        p2 = p2 * jnp.minimum(1.0 / mx, 5.0)

    sc_ref[0, 0] = p2.astype(sc_ref.dtype)

    head_out = jnp.dot(p2.astype(bf16), vh, preferred_element_type=f32)  # (S, dh)
    # Accumulate this head's slice of the output projection (no concatenate).
    acc_ref[...] += jnp.dot(head_out.astype(bf16), wo_ref[...].astype(bf16),
                            preferred_element_type=f32)

    @pl.when(h == pl.num_programs(1) - 1)
    def _():
        proj = acc_ref[...] + bo_ref[...]
        resid = qin_ref[0] + proj                        # dropout == identity (eval)
        mu = jnp.mean(resid, axis=-1, keepdims=True)
        var = jnp.mean((resid - mu) ** 2, axis=-1, keepdims=True)
        normed = (resid - mu) * jax.lax.rsqrt(var + 1e-5)
        out_ref[0] = (normed * lng_ref[...] + lnb_ref[...]).astype(out_ref.dtype)


def _vmem_limit_bytes(block_bytes):
    est = 2 * int(block_bytes) + (2 << 20)               # double-buffer + headroom
    return int(min(max(est, 4 << 20), 48 << 20))


def cdm_transformer_layer(q, k, v, params, *, n_heads, peek_cur=False,
                          lens=None, scores_dtype=jnp.float32):
    """Pallas implementation of CDMTransformerLayer.forward (eval mode)."""
    del lens  # eval-mode semantics; training mask dropout not implemented.
    B, S, D = q.shape
    H = n_heads
    assert D % H == 0
    dh = D // H

    # ---------------- Kernel 1: projections ----------------
    a_block_bytes = 3 * S * D * 4 + 2 * D * D * 4 + 2 * D * 4 + 3 * S * D * 2
    proj = pl.pallas_call(
        functools.partial(_proj_kernel, n_heads=H),
        out_shape=tuple(jax.ShapeDtypeStruct((B, H, S, dh), jnp.bfloat16)
                        for _ in range(3)),
        grid_spec=pltpu.PrefetchScalarGridSpec(
            num_scalar_prefetch=0,
            grid=(B,),
            in_specs=[
                pl.BlockSpec((1, S, D), lambda b: (b, 0, 0)),   # q
                pl.BlockSpec((1, S, D), lambda b: (b, 0, 0)),   # k
                pl.BlockSpec((1, S, D), lambda b: (b, 0, 0)),   # v
                pl.BlockSpec((D, D), lambda b: (0, 0)),         # Wq^T
                pl.BlockSpec((1, D), lambda b: (0, 0)),         # bq
                pl.BlockSpec((D, D), lambda b: (0, 0)),         # Wv^T
                pl.BlockSpec((1, D), lambda b: (0, 0)),         # bv
            ],
            out_specs=[
                pl.BlockSpec((1, H, S, dh), lambda b: (b, 0, 0, 0)),
                pl.BlockSpec((1, H, S, dh), lambda b: (b, 0, 0, 0)),
                pl.BlockSpec((1, H, S, dh), lambda b: (b, 0, 0, 0)),
            ],
        ),
        compiler_params=pltpu.CompilerParams(
            dimension_semantics=("parallel",),
            vmem_limit_bytes=_vmem_limit_bytes(a_block_bytes)),
    )(q, k, v, params["wq_t"], params["bq"], params["wv_t"], params["bv"])
    qh, kh, vh = proj

    # ---------------- Kernel 2: attention + out proj + residual + LN ---------
    # Constant strictly-triangular matrix: tail = p @ U, U[j', j] = 1 if j' > j.
    idx = jnp.arange(S)
    tailmat = (idx[:, None] > idx[None, :]).astype(jnp.bfloat16)
    neg_abs_gamma = -jnp.abs(params["gammas"][0]).astype(jnp.float32)   # (H,)

    sc_itemsize = jnp.dtype(scores_dtype).itemsize
    b_block_bytes = (3 * S * dh * 2 + S * S * 2 + S * D * 4 + dh * D * 4 +
                     3 * D * 4 + S * D * 4 + S * S * sc_itemsize + S * D * 4)

    out, scores = pl.pallas_call(
        functools.partial(_attn_kernel, peek_cur=peek_cur),
        out_shape=(
            jax.ShapeDtypeStruct((B, S, D), jnp.float32),
            jax.ShapeDtypeStruct((B, H, S, S), scores_dtype),
        ),
        grid_spec=pltpu.PrefetchScalarGridSpec(
            num_scalar_prefetch=0,
            grid=(B, H),
            in_specs=[
                pl.BlockSpec((1, 1, S, dh), lambda b, h: (b, h, 0, 0)),  # qh
                pl.BlockSpec((1, 1, S, dh), lambda b, h: (b, h, 0, 0)),  # kh
                pl.BlockSpec((1, 1, S, dh), lambda b, h: (b, h, 0, 0)),  # vh
                pl.BlockSpec((S, S), lambda b, h: (0, 0)),               # tail matrix
                pl.BlockSpec(memory_space=pltpu.MemorySpace.SMEM),       # -|gamma|
                pl.BlockSpec((1, S, D), lambda b, h: (b, 0, 0)),         # original q
                pl.BlockSpec((dh, D), lambda b, h: (h, 0)),              # Wo^T head rows
                pl.BlockSpec((1, D), lambda b, h: (0, 0)),               # bo
                pl.BlockSpec((1, D), lambda b, h: (0, 0)),               # ln gamma
                pl.BlockSpec((1, D), lambda b, h: (0, 0)),               # ln beta
            ],
            out_specs=[
                pl.BlockSpec((1, S, D), lambda b, h: (b, 0, 0)),
                pl.BlockSpec((1, 1, S, S), lambda b, h: (b, h, 0, 0)),
            ],
            scratch_shapes=[pltpu.VMEM((S, D), jnp.float32)],
        ),
        compiler_params=pltpu.CompilerParams(
            dimension_semantics=("parallel", "arbitrary"),
            vmem_limit_bytes=_vmem_limit_bytes(b_block_bytes)),
    )(qh, kh, vh, tailmat, neg_abs_gamma, q,
      params["wo_t"], params["bo"], params["ln_gamma"], params["ln_beta"])
    return out, scores


# ---------------------------------------------------------------------------
# Pure-JAX reference (mirrors the PyTorch forward exactly, f32) for validation.
# ---------------------------------------------------------------------------
def _reference(q, k, v, params, *, n_heads, peek_cur=False):
    B, S, D = q.shape
    dh = D // n_heads

    def lin(x, wt, b):
        return x @ wt + b

    qp = lin(q, params["wq_t"], params["bq"][0])
    kp = lin(k, params["wq_t"], params["bq"][0])
    vp = lin(v, params["wv_t"], params["bv"][0])

    def heads(x):
        return x.reshape(B, S, n_heads, dh).transpose(0, 2, 1, 3)

    qh, kh, vh = heads(qp), heads(kp), heads(vp)
    scores = jnp.einsum("bhqd,bhkd->bhqk", qh, kh) / math.sqrt(dh)

    row = jnp.arange(S)[:, None]
    col = jnp.arange(S)[None, :]
    mask = (col <= row) if peek_cur else (col < row)
    mask4 = mask[None, None]
    pos_eff = jnp.abs(col - row).astype(jnp.float32)[None, None]

    neg = jnp.float32(-1e32)
    sm = jnp.where(mask4, scores, neg)
    p = jax.nn.softmax(sm, axis=-1)
    distcum = jnp.cumsum(p, axis=-1)
    disttot = jnp.sum(p, axis=-1, keepdims=True)
    dist = jnp.sqrt(jnp.maximum((disttot - distcum) * pos_eff, 0.0))
    gamma = -jnp.abs(params["gammas"][0])[None, :, None, None]
    total_effect = jnp.clip(jnp.exp(dist * gamma), 1e-5, 1e5)
    scores = scores * total_effect

    scores = jnp.where(mask4, scores, neg)
    scores = jax.nn.softmax(scores, axis=-1)
    scores = jnp.where(mask4, scores, 0.0)
    if not peek_cur:
        mx = jnp.max(scores, axis=-1, keepdims=True)
        scores = scores * jnp.minimum(1.0 / mx, 5.0)

    out = jnp.einsum("bhqk,bhkd->bhqd", scores, vh)
    out = out.transpose(0, 2, 1, 3).reshape(B, S, D)
    out = lin(out, params["wo_t"], params["bo"][0])

    resid = q + out
    mu = jnp.mean(resid, axis=-1, keepdims=True)
    var = jnp.mean((resid - mu) ** 2, axis=-1, keepdims=True)
    normed = (resid - mu) / jnp.sqrt(var + 1e-5)
    normed = normed * params["ln_gamma"][0] + params["ln_beta"][0]
    return normed, scores


def _init_params(key, d_model, n_heads):
    ks = jax.random.split(key, 7)
    bound = 1.0 / math.sqrt(d_model)
    u = lambda k, shape, b: jax.random.uniform(k, shape, jnp.float32, -b, b)
    xavier_bound = math.sqrt(6.0 / 2.0)   # xavier_uniform on (H,1,1)
    return {
        "wq_t": u(ks[0], (d_model, d_model), bound),
        "bq":   u(ks[1], (1, d_model), bound),
        "wv_t": u(ks[2], (d_model, d_model), bound),
        "bv":   u(ks[3], (1, d_model), bound),
        "wo_t": u(ks[4], (d_model, d_model), bound),
        "bo":   u(ks[5], (1, d_model), bound),
        "gammas": u(ks[6], (1, n_heads), xavier_bound),
        "ln_gamma": jnp.ones((1, d_model), jnp.float32),
        "ln_beta":  jnp.zeros((1, d_model), jnp.float32),
    }


if __name__ == "__main__":
    B, S, D, H = 2, 8, 32, 4
    key = jax.random.PRNGKey(0)
    kq, kk, kv, kp = jax.random.split(key, 4)
    q = jax.random.normal(kq, (B, S, D), jnp.float32)
    k = jax.random.normal(kk, (B, S, D), jnp.float32)
    v = jax.random.normal(kv, (B, S, D), jnp.float32)
    lens = jnp.array([S, S], jnp.int32)   # accepted but unused (eval mode)

    params = _init_params(kp, D, H)

    out, scores = cdm_transformer_layer(q, k, v, params, n_heads=H,
                                        peek_cur=False, lens=lens)
    jax.block_until_ready((out, scores))

    ref_out, ref_scores = _reference(q, k, v, params, n_heads=H,
                                     peek_cur=False)
    assert out.shape == (B, S, D) and scores.shape == (B, H, S, S)
    # bf16 MXU operands + approx reciprocals -> looser tolerance vs f32 ref.
    assert jnp.allclose(out, ref_out, atol=5e-2, rtol=5e-2)
    assert jnp.allclose(scores.astype(jnp.float32), ref_scores,
                        atol=5e-2, rtol=5e-2)
    print("KERNEL_OK")
</pallas_src>

<mosaic_0001>
module attributes {stable_mosaic.version = 11 : i64} {
  func.func @_proj_kernel(%arg0: i32, %arg1: memref<1x8x32xf32, #tpu.memory_space<vmem>>, %arg2: memref<1x8x32xf32, #tpu.memory_space<vmem>>, %arg3: memref<1x8x32xf32, #tpu.memory_space<vmem>>, %arg4: memref<32x32xf32, #tpu.memory_space<vmem>>, %arg5: memref<1x32xf32, #tpu.memory_space<vmem>>, %arg6: memref<32x32xf32, #tpu.memory_space<vmem>>, %arg7: memref<1x32xf32, #tpu.memory_space<vmem>>, %arg8: memref<1x4x8x8xbf16, #tpu.memory_space<vmem>>, %arg9: memref<1x4x8x8xbf16, #tpu.memory_space<vmem>>, %arg10: memref<1x4x8x8xbf16, #tpu.memory_space<vmem>>) attributes {dimension_semantics = [#tpu.dimension_semantics<parallel>], iteration_bounds = array<i64: 2>, scalar_prefetch = 0 : i64, scratch_operands = 0 : i64, tpu.core_type = #tpu.core_type<tc>, window_params = [{transform_indices = @transform_0, window_bounds = array<i64: 1, 8, 32>}, {transform_indices = @transform_1, window_bounds = array<i64: 1, 8, 32>}, {transform_indices = @transform_2, window_bounds = array<i64: 1, 8, 32>}, {pipeline_mode = #tpu.pipeline_mode<synchronous>, transform_indices = @transform_3, window_bounds = array<i64: 32, 32>}, {pipeline_mode = #tpu.pipeline_mode<synchronous>, transform_indices = @transform_4, window_bounds = array<i64: 1, 32>}, {pipeline_mode = #tpu.pipeline_mode<synchronous>, transform_indices = @transform_5, window_bounds = array<i64: 32, 32>}, {pipeline_mode = #tpu.pipeline_mode<synchronous>, transform_indices = @transform_6, window_bounds = array<i64: 1, 32>}, {transform_indices = @transform_7, window_bounds = array<i64: 1, 4, 8, 8>}, {transform_indices = @transform_8, window_bounds = array<i64: 1, 4, 8, 8>}, {transform_indices = @transform_9, window_bounds = array<i64: 1, 4, 8, 8>}]} {
    %c0 = arith.constant 0 : index
    %c0_0 = arith.constant 0 : index
    %0 = vector.load %arg4[%c0, %c0_0] : memref<32x32xf32, #tpu.memory_space<vmem>>, vector<32x32xf32>
    %1 = arith.truncf %0 : vector<32x32xf32> to vector<32x32xbf16>
    %c0_1 = arith.constant 0 : index
    %c0_2 = arith.constant 0 : index
    %2 = vector.load %arg6[%c0_1, %c0_2] : memref<32x32xf32, #tpu.memory_space<vmem>>, vector<32x32xf32>
    %3 = arith.truncf %2 : vector<32x32xf32> to vector<32x32xbf16>
    %c0_3 = arith.constant 0 : index
    %c0_4 = arith.constant 0 : index
    %4 = vector.load %arg5[%c0_3, %c0_4] : memref<1x32xf32, #tpu.memory_space<vmem>>, vector<1x32xf32>
    %c0_5 = arith.constant 0 : index
    %c0_6 = arith.constant 0 : index
    %5 = vector.load %arg7[%c0_5, %c0_6] : memref<1x32xf32, #tpu.memory_space<vmem>>, vector<1x32xf32>
    %c0_7 = arith.constant 0 : index
    %c0_8 = arith.constant 0 : index
    %c0_9 = arith.constant 0 : index
    %6 = vector.load %arg1[%c0_7, %c0_8, %c0_9] : memref<1x8x32xf32, #tpu.memory_space<vmem>>, vector<1x8x32xf32>
    %7 = vector.shape_cast %6 : vector<1x8x32xf32> to vector<8x32xf32>
    %8 = arith.truncf %7 : vector<8x32xf32> to vector<8x32xbf16>
    %cst = arith.constant dense<0.000000e+00> : vector<8x32xf32>
    %9 = tpu.matmul %8, %1, %cst {dimension_numbers = #tpu.dot_dimension_numbers<[1], [0], [0], [1], [0, 0, 1, 1], [], []>} : vector<8x32xbf16>, vector<32x32xbf16>, vector<8x32xf32> -> vector<8x32xf32>
    %10 = vector.broadcast %4 : vector<1x32xf32> to vector<8x32xf32>
    %11 = arith.addf %9, %10 : vector<8x32xf32>
    %c0_10 = arith.constant 0 : index
    %c0_11 = arith.constant 0 : index
    %c0_12 = arith.constant 0 : index
    %12 = vector.load %arg2[%c0_10, %c0_11, %c0_12] : memref<1x8x32xf32, #tpu.memory_space<vmem>>, vector<1x8x32xf32>
    %13 = vector.shape_cast %12 : vector<1x8x32xf32> to vector<8x32xf32>
    %14 = arith.truncf %13 : vector<8x32xf32> to vector<8x32xbf16>
    %cst_13 = arith.constant dense<0.000000e+00> : vector<8x32xf32>
    %15 = tpu.matmul %14, %1, %cst_13 {dimension_numbers = #tpu.dot_dimension_numbers<[1], [0], [0], [1], [0, 0, 1, 1], [], []>} : vector<8x32xbf16>, vector<32x32xbf16>, vector<8x32xf32> -> vector<8x32xf32>
    %16 = vector.broadcast %4 : vector<1x32xf32> to vector<8x32xf32>
    %17 = arith.addf %15, %16 : vector<8x32xf32>
    %c0_14 = arith.constant 0 : index
    %c0_15 = arith.constant 0 : index
    %c0_16 = arith.constant 0 : index
    %18 = vector.load %arg3[%c0_14, %c0_15, %c0_16] : memref<1x8x32xf32, #tpu.memory_space<vmem>>, vector<1x8x32xf32>
    %19 = vector.shape_cast %18 : vector<1x8x32xf32> to vector<8x32xf32>
    %20 = arith.truncf %19 : vector<8x32xf32> to vector<8x32xbf16>
    %cst_17 = arith.constant dense<0.000000e+00> : vector<8x32xf32>
    %21 = tpu.matmul %20, %3, %cst_17 {dimension_numbers = #tpu.dot_dimension_numbers<[1], [0], [0], [1], [0, 0, 1, 1], [], []>} : vector<8x32xbf16>, vector<32x32xbf16>, vector<8x32xf32> -> vector<8x32xf32>
    %22 = vector.broadcast %5 : vector<1x32xf32> to vector<8x32xf32>
    %23 = arith.addf %21, %22 : vector<8x32xf32>
    %24 = vector.extract_strided_slice %11 {offsets = [0, 0], sizes = [8, 8], strides = [1, 1]} : vector<8x32xf32> to vector<8x8xf32>
    %25 = arith.truncf %24 : vector<8x8xf32> to vector<8x8xbf16>
    %c0_18 = arith.constant 0 : index
    %c0_19 = arith.constant 0 : index
    %c0_20 = arith.constant 0 : index
    %c0_21 = arith.constant 0 : index
    %26 = vector.load %arg8[%c0_18, %c0_19, %c0_20, %c0_21] : memref<1x4x8x8xbf16, #tpu.memory_space<vmem>>, vector<1x1x8x8xbf16>
    %27 = vector.shape_cast %26 : vector<1x1x8x8xbf16> to vector<8x8xbf16>
    %28 = vector.shape_cast %25 : vector<8x8xbf16> to vector<1x1x8x8xbf16>
    tpu.vector_store %arg8[%c0_18, %c0_19, %c0_20, %c0_21], %28 {strides = array<i32>} : memref<1x4x8x8xbf16, #tpu.memory_space<vmem>>, vector<1x1x8x8xbf16>,
    %29 = vector.extract_strided_slice %17 {offsets = [0, 0], sizes = [8, 8], strides = [1, 1]} : vector<8x32xf32> to vector<8x8xf32>
    %30 = arith.truncf %29 : vector<8x8xf32> to vector<8x8xbf16>
    %c0_22 = arith.constant 0 : index
    %c0_23 = arith.constant 0 : index
    %c0_24 = arith.constant 0 : index
    %c0_25 = arith.constant 0 : index
    %31 = vector.load %arg9[%c0_22, %c0_23, %c0_24, %c0_25] : memref<1x4x8x8xbf16, #tpu.memory_space<vmem>>, vector<1x1x8x8xbf16>
    %32 = vector.shape_cast %31 : vector<1x1x8x8xbf16> to vector<8x8xbf16>
    %33 = vector.shape_cast %30 : vector<8x8xbf16> to vector<1x1x8x8xbf16>
    tpu.vector_store %arg9[%c0_22, %c0_23, %c0_24, %c0_25], %33 {strides = array<i32>} : memref<1x4x8x8xbf16, #tpu.memory_space<vmem>>, vector<1x1x8x8xbf16>,
    %34 = vector.extract_strided_slice %23 {offsets = [0, 0], sizes = [8, 8], strides = [1, 1]} : vector<8x32xf32> to vector<8x8xf32>
    %35 = arith.truncf %34 : vector<8x8xf32> to vector<8x8xbf16>
    %c0_26 = arith.constant 0 : index
    %c0_27 = arith.constant 0 : index
    %c0_28 = arith.constant 0 : index
    %c0_29 = arith.constant 0 : index
    %36 = vector.load %arg10[%c0_26, %c0_27, %c0_28, %c0_29] : memref<1x4x8x8xbf16, #tpu.memory_space<vmem>>, vector<1x1x8x8xbf16>
    %37 = vector.shape_cast %36 : vector<1x1x8x8xbf16> to vector<8x8xbf16>
    %38 = vector.shape_cast %35 : vector<8x8xbf16> to vector<1x1x8x8xbf16>
    tpu.vector_store %arg10[%c0_26, %c0_27, %c0_28, %c0_29], %38 {strides = array<i32>} : memref<1x4x8x8xbf16, #tpu.memory_space<vmem>>, vector<1x1x8x8xbf16>,
    %39 = vector.extract_strided_slice %11 {offsets = [0, 8], sizes = [8, 8], strides = [1, 1]} : vector<8x32xf32> to vector<8x8xf32>
    %40 = arith.truncf %39 : vector<8x8xf32> to vector<8x8xbf16>
    %c0_30 = arith.constant 0 : index
    %c1 = arith.constant 1 : index
    %c0_31 = arith.constant 0 : index
    %c0_32 = arith.constant 0 : index
    %41 = vector.load %arg8[%c0_30, %c1, %c0_31, %c0_32] : memref<1x4x8x8xbf16, #tpu.memory_space<vmem>>, vector<1x1x8x8xbf16>
    %42 = vector.shape_cast %41 : vector<1x1x8x8xbf16> to vector<8x8xbf16>
    %43 = vector.shape_cast %40 : vector<8x8xbf16> to vector<1x1x8x8xbf16>
    tpu.vector_store %arg8[%c0_30, %c1, %c0_31, %c0_32], %43 {strides = array<i32>} : memref<1x4x8x8xbf16, #tpu.memory_space<vmem>>, vector<1x1x8x8xbf16>,
    %44 = vector.extract_strided_slice %17 {offsets = [0, 8], sizes = [8, 8], strides = [1, 1]} : vector<8x32xf32> to vector<8x8xf32>
    %45 = arith.truncf %44 : vector<8x8xf32> to vector<8x8xbf16>
    %c0_33 = arith.constant 0 : index
    %c1_34 = arith.constant 1 : index
    %c0_35 = arith.constant 0 : index
    %c0_36 = arith.constant 0 : index
    %46 = vector.load %arg9[%c0_33, %c1_34, %c0_35, %c0_36] : memref<1x4x8x8xbf16, #tpu.memory_space<vmem>>, vector<1x1x8x8xbf16>
    %47 = vector.shape_cast %46 : vector<1x1x8x8xbf16> to vector<8x8xbf16>
    %48 = vector.shape_cast %45 : vector<8x8xbf16> to vector<1x1x8x8xbf16>
    tpu.vector_store %arg9[%c0_33, %c1_34, %c0_35, %c0_36], %48 {strides = array<i32>} : memref<1x4x8x8xbf16, #tpu.memory_space<vmem>>, vector<1x1x8x8xbf16>,
    %49 = vector.extract_strided_slice %23 {offsets = [0, 8], sizes = [8, 8], strides = [1, 1]} : vector<8x32xf32> to vector<8x8xf32>
    %50 = arith.truncf %49 : vector<8x8xf32> to vector<8x8xbf16>
    %c0_37 = arith.constant 0 : index
    %c1_38 = arith.constant 1 : index
    %c0_39 = arith.constant 0 : index
    %c0_40 = arith.constant 0 : index
    %51 = vector.load %arg10[%c0_37, %c1_38, %c0_39, %c0_40] : memref<1x4x8x8xbf16, #tpu.memory_space<vmem>>, vector<1x1x8x8xbf16>
    %52 = vector.shape_cast %51 : vector<1x1x8x8xbf16> to vector<8x8xbf16>
    %53 = vector.shape_cast %50 : vector<8x8xbf16> to vector<1x1x8x8xbf16>
    tpu.vector_store %arg10[%c0_37, %c1_38, %c0_39, %c0_40], %53 {strides = array<i32>} : memref<1x4x8x8xbf16, #tpu.memory_space<vmem>>, vector<1x1x8x8xbf16>,
    %54 = vector.extract_strided_slice %11 {offsets = [0, 16], sizes = [8, 8], strides = [1, 1]} : vector<8x32xf32> to vector<8x8xf32>
    %55 = arith.truncf %54 : vector<8x8xf32> to vector<8x8xbf16>
    %c0_41 = arith.constant 0 : index
    %c2 = arith.constant 2 : index
    %c0_42 = arith.constant 0 : index
    %c0_43 = arith.constant 0 : index
    %56 = vector.load %arg8[%c0_41, %c2, %c0_42, %c0_43] : memref<1x4x8x8xbf16, #tpu.memory_space<vmem>>, vector<1x1x8x8xbf16>
    %57 = vector.shape_cast %56 : vector<1x1x8x8xbf16> to vector<8x8xbf16>
    %58 = vector.shape_cast %55 : vector<8x8xbf16> to vector<1x1x8x8xbf16>
    tpu.vector_store %arg8[%c0_41, %c2, %c0_42, %c0_43], %58 {strides = array<i32>} : memref<1x4x8x8xbf16, #tpu.memory_space<vmem>>, vector<1x1x8x8xbf16>,
    %59 = vector.extract_strided_slice %17 {offsets = [0, 16], sizes = [8, 8], strides = [1, 1]} : vector<8x32xf32> to vector<8x8xf32>
    %60 = arith.truncf %59 : vector<8x8xf32> to vector<8x8xbf16>
    %c0_44 = arith.constant 0 : index
    %c2_45 = arith.constant 2 : index
    %c0_46 = arith.constant 0 : index
    %c0_47 = arith.constant 0 : index
    %61 = vector.load %arg9[%c0_44, %c2_45, %c0_46, %c0_47] : memref<1x4x8x8xbf16, #tpu.memory_space<vmem>>, vector<1x1x8x8xbf16>
    %62 = vector.shape_cast %61 : vector<1x1x8x8xbf16> to vector<8x8xbf16>
    %63 = vector.shape_cast %60 : vector<8x8xbf16> to vector<1x1x8x8xbf16>
    tpu.vector_store %arg9[%c0_44, %c2_45, %c0_46, %c0_47], %63 {strides = array<i32>} : memref<1x4x8x8xbf16, #tpu.memory_space<vmem>>, vector<1x1x8x8xbf16>,
    %64 = vector.extract_strided_slice %23 {offsets = [0, 16], sizes = [8, 8], strides = [1, 1]} : vector<8x32xf32> to vector<8x8xf32>
    %65 = arith.truncf %64 : vector<8x8xf32> to vector<8x8xbf16>
    %c0_48 = arith.constant 0 : index
    %c2_49 = arith.constant 2 : index
    %c0_50 = arith.constant 0 : index
    %c0_51 = arith.constant 0 : index
    %66 = vector.load %arg10[%c0_48, %c2_49, %c0_50, %c0_51] : memref<1x4x8x8xbf16, #tpu.memory_space<vmem>>, vector<1x1x8x8xbf16>
    %67 = vector.shape_cast %66 : vector<1x1x8x8xbf16> to vector<8x8xbf16>
    %68 = vector.shape_cast %65 : vector<8x8xbf16> to vector<1x1x8x8xbf16>
    tpu.vector_store %arg10[%c0_48, %c2_49, %c0_50, %c0_51], %68 {strides = array<i32>} : memref<1x4x8x8xbf16, #tpu.memory_space<vmem>>, vector<1x1x8x8xbf16>,
    %69 = vector.extract_strided_slice %11 {offsets = [0, 24], sizes = [8, 8], strides = [1, 1]} : vector<8x32xf32> to vector<8x8xf32>
    %70 = arith.truncf %69 : vector<8x8xf32> to vector<8x8xbf16>
    %c0_52 = arith.constant 0 : index
    %c3 = arith.constant 3 : index
    %c0_53 = arith.constant 0 : index
    %c0_54 = arith.constant 0 : index
    %71 = vector.load %arg8[%c0_52, %c3, %c0_53, %c0_54] : memref<1x4x8x8xbf16, #tpu.memory_space<vmem>>, vector<1x1x8x8xbf16>
    %72 = vector.shape_cast %71 : vector<1x1x8x8xbf16> to vector<8x8xbf16>
    %73 = vector.shape_cast %70 : vector<8x8xbf16> to vector<1x1x8x8xbf16>
    tpu.vector_store %arg8[%c0_52, %c3, %c0_53, %c0_54], %73 {strides = array<i32>} : memref<1x4x8x8xbf16, #tpu.memory_space<vmem>>, vector<1x1x8x8xbf16>,
    %74 = vector.extract_strided_slice %17 {offsets = [0, 24], sizes = [8, 8], strides = [1, 1]} : vector<8x32xf32> to vector<8x8xf32>
    %75 = arith.truncf %74 : vector<8x8xf32> to vector<8x8xbf16>
    %c0_55 = arith.constant 0 : index
    %c3_56 = arith.constant 3 : index
    %c0_57 = arith.constant 0 : index
    %c0_58 = arith.constant 0 : index
    %76 = vector.load %arg9[%c0_55, %c3_56, %c0_57, %c0_58] : memref<1x4x8x8xbf16, #tpu.memory_space<vmem>>, vector<1x1x8x8xbf16>
    %77 = vector.shape_cast %76 : vector<1x1x8x8xbf16> to vector<8x8xbf16>
    %78 = vector.shape_cast %75 : vector<8x8xbf16> to vector<1x1x8x8xbf16>
    tpu.vector_store %arg9[%c0_55, %c3_56, %c0_57, %c0_58], %78 {strides = array<i32>} : memref<1x4x8x8xbf16, #tpu.memory_space<vmem>>, vector<1x1x8x8xbf16>,
    %79 = vector.extract_strided_slice %23 {offsets = [0, 24], sizes = [8, 8], strides = [1, 1]} : vector<8x32xf32> to vector<8x8xf32>
    %80 = arith.truncf %79 : vector<8x8xf32> to vector<8x8xbf16>
    %c0_59 = arith.constant 0 : index
    %c3_60 = arith.constant 3 : index
    %c0_61 = arith.constant 0 : index
    %c0_62 = arith.constant 0 : index
    %81 = vector.load %arg10[%c0_59, %c3_60, %c0_61, %c0_62] : memref<1x4x8x8xbf16, #tpu.memory_space<vmem>>, vector<1x1x8x8xbf16>
    %82 = vector.shape_cast %81 : vector<1x1x8x8xbf16> to vector<8x8xbf16>
    %83 = vector.shape_cast %80 : vector<8x8xbf16> to vector<1x1x8x8xbf16>
    tpu.vector_store %arg10[%c0_59, %c3_60, %c0_61, %c0_62], %83 {strides = array<i32>} : memref<1x4x8x8xbf16, #tpu.memory_space<vmem>>, vector<1x1x8x8xbf16>,
    return
  }
  func.func @transform_0(%arg0: i32) -> (i32, i32, i32) {
    %c0_i32 = arith.constant 0 : i32
    %c0_i32_0 = arith.constant 0 : i32
    %c0_i32_1 = arith.constant 0 : i32
    return %arg0, %c0_i32, %c0_i32_0 : i32, i32, i32
  }
  func.func @transform_1(%arg0: i32) -> (i32, i32, i32) {
    %c0_i32 = arith.constant 0 : i32
    %c0_i32_0 = arith.constant 0 : i32
    %c0_i32_1 = arith.constant 0 : i32
    return %arg0, %c0_i32, %c0_i32_0 : i32, i32, i32
  }
  func.func @transform_2(%arg0: i32) -> (i32, i32, i32) {
    %c0_i32 = arith.constant 0 : i32
    %c0_i32_0 = arith.constant 0 : i32
    %c0_i32_1 = arith.constant 0 : i32
    return %arg0, %c0_i32, %c0_i32_0 : i32, i32, i32
  }
  func.func @transform_3(%arg0: i32) -> (i32, i32) {
    %c0_i32 = arith.constant 0 : i32
    %c0_i32_0 = arith.constant 0 : i32
    %c0_i32_1 = arith.constant 0 : i32
    return %c0_i32, %c0_i32_0 : i32, i32
  }
  func.func @transform_4(%arg0: i32) -> (i32, i32) {
    %c0_i32 = arith.constant 0 : i32
    %c0_i32_0 = arith.constant 0 : i32
    %c0_i32_1 = arith.constant 0 : i32
    return %c0_i32, %c0_i32_0 : i32, i32
  }
  func.func @transform_5(%arg0: i32) -> (i32, i32) {
    %c0_i32 = arith.constant 0 : i32
    %c0_i32_0 = arith.constant 0 : i32
    %c0_i32_1 = arith.constant 0 : i32
    return %c0_i32, %c0_i32_0 : i32, i32
  }
  func.func @transform_6(%arg0: i32) -> (i32, i32) {
    %c0_i32 = arith.constant 0 : i32
    %c0_i32_0 = arith.constant 0 : i32
    %c0_i32_1 = arith.constant 0 : i32
    return %c0_i32, %c0_i32_0 : i32, i32
  }
  func.func @transform_7(%arg0: i32) -> (i32, i32, i32, i32) {
    %c0_i32 = arith.constant 0 : i32
    %c0_i32_0 = arith.constant 0 : i32
    %c0_i32_1 = arith.constant 0 : i32
    %c0_i32_2 = arith.constant 0 : i32
    return %arg0, %c0_i32, %c0_i32_0, %c0_i32_1 : i32, i32, i32, i32
  }
  func.func @transform_8(%arg0: i32) -> (i32, i32, i32, i32) {
    %c0_i32 = arith.constant 0 : i32
    %c0_i32_0 = arith.constant 0 : i32
    %c0_i32_1 = arith.constant 0 : i32
    %c0_i32_2 = arith.constant 0 : i32
    return %arg0, %c0_i32, %c0_i32_0, %c0_i32_1 : i32, i32, i32, i32
  }
  func.func @transform_9(%arg0: i32) -> (i32, i32, i32, i32) {
    %c0_i32 = arith.constant 0 : i32
    %c0_i32_0 = arith.constant 0 : i32
    %c0_i32_1 = arith.constant 0 : i32
    %c0_i32_2 = arith.constant 0 : i32
    return %arg0, %c0_i32, %c0_i32_0, %c0_i32_1 : i32, i32, i32, i32
  }
}

</mosaic_0001>

<llo_original>
// kernel: tpu_custom_call.1
$region0: #{tpu_custom_call.1}
  #allocation0 [shape = 'u32[]', space=smem, size = 0x4, offset = 0x4, fixed_abs, tag = 'smem constant byte address 0x4 - core index']
  #allocation1 [shape = 'u32[144,128]{1,0:T(1,128)}', space=vmem, size = 0x12000, scoped, tag = 'internal scratch']
  %s0 = inlined_call_operand.hbm [shape: f32[2,8,32], index: 0, kind: input, shape index: {}]
  %s1 = inlined_call_operand.hbm [shape: f32[2,8,32], index: 1, kind: input, shape index: {}]
  %s2 = inlined_call_operand.hbm [shape: f32[2,8,32], index: 2, kind: input, shape index: {}]
  %s3 = inlined_call_operand.hbm [shape: f32[32,32], index: 3, kind: input, shape index: {}]
  %s4 = inlined_call_operand.vmem [shape: f32[1,32], index: 4, kind: input, shape index: {}]
  %s5 = inlined_call_operand.hbm [shape: f32[32,32], index: 5, kind: input, shape index: {}]
  %s6 = inlined_call_operand.vmem [shape: f32[1,32], index: 6, kind: input, shape index: {}]
  %s7 = inlined_call_operand.hbm [shape: bf16[2,4,8,8], index: 7, kind: output, shape index: {0}]
  %s8 = inlined_call_operand.hbm [shape: bf16[2,4,8,8], index: 8, kind: output, shape index: {1}]
  %s9 = inlined_call_operand.hbm [shape: bf16[2,4,8,8], index: 9, kind: output, shape index: {2}]
  %10 = xla_tuple %s7, %s8, %s9
  %s11 = sld [smem:[#allocation0]]
  $region97: #{tpu_custom_call.1} parent=0
    _
  %s13 = ssub.s32 1, %s11
  %s14 = scalar_select 0, %s13, %s11
  $region1: #{tpu_custom_call.1} parent=0
    #allocation2 [shape = 'u8[8192]{0}', space=vmem, size = 0x2000, scoped, tag = 'input window, operand 0']
    #allocation3 [shape = 's32[2]{0}', space=sflag, size = 0x8, scoped, tag = 'scoped memory for tpu_custom_call.1']
    #allocation4 [shape = 's32[2]{0}', space=sflag, size = 0x8, scoped, tag = 'scoped memory for tpu_custom_call.1']
    #allocation5 [shape = 'u8[8192]{0}', space=vmem, size = 0x2000, scoped, tag = 'input window, operand 1']
    #allocation6 [shape = 's32[2]{0}', space=sflag, size = 0x8, scoped, tag = 'scoped memory for tpu_custom_call.1']
    #allocation7 [shape = 'u8[8192]{0}', space=vmem, size = 0x2000, scoped, tag = 'input window, operand 2']
    #allocation8 [shape = 'u8[16384]{0}', space=vmem, size = 0x4000, scoped, tag = 'input window, operand 3, single buffered']
    #allocation9 [shape = 's32[1]{0}', space=sflag, size = 0x4, scoped, tag = 'scoped memory for tpu_custom_call.1']
    #allocation10 [shape = 'u8[16384]{0}', space=vmem, size = 0x4000, scoped, tag = 'input window, operand 5, single buffered']
    #allocation11 [shape = 'u8[16384]{0}', space=vmem, size = 0x4000, scoped, tag = 'output window, operand 0']
    #allocation12 [shape = 'u8[16384]{0}', space=vmem, size = 0x4000, scoped, tag = 'output window, operand 1']
    #allocation13 [shape = 's32[2]{0}', space=sflag, size = 0x8, scoped, tag = 'scoped memory for tpu_custom_call.1']
    #allocation14 [shape = 'u8[16384]{0}', space=vmem, size = 0x4000, scoped, tag = 'output window, operand 2']
    %15 = vsyncpa [#allocation3], 0
    %s16 = scalar_lea.sflag [#allocation3], 1
    %17 = vsyncpa %s16, 0
    %18 = vsyncpa [#allocation6], 0
    %s19 = scalar_lea.sflag [#allocation6], 1
    %20 = vsyncpa %s19, 0
    %21 = vsyncpa [#allocation9], 0
    %22 = vsyncpa [#allocation4], 0
    %s23 = scalar_lea.sflag [#allocation4], 1
    %24 = vsyncpa %s23, 0
    %25 = vsyncpa [#allocation13], 0
    %s26 = scalar_lea.sflag [#allocation13], 1
    %27 = vsyncpa %s26, 0
    loop: start=0, step=1, limit=4
    $region2: #{tpu_custom_call.1} parent=1 // loop_pre_header
      _
    $region3: #{tpu_custom_call.1} parent=1 // loop_header
      %s29 = sphi 0, %s33
      %p30 = scmp.ge.s32.totalorder %s29, 4
      %s39 = sphi 0, %s41
      %s42 = sphi 0, %s39
      %s43 = sphi 0, %s42
      %s59 = sphi 0, %s43
      %s65 = sphi 0, %s67
      %s68 = sphi 0, %s65
      %s69 = sphi 0, %s68
      %s85 = sphi 0, %s69
      %s91 = sphi 0, %s93
      %s94 = sphi 0, %s91
      %s95 = sphi 0, %s94
      %s111 = sphi 0, %s95
      %s115 = sphi 0, %s115
      %s117 = sphi 0, %s115
      %s118 = sphi 0, %s117
      %s132 = sphi 0, %s118
      %s136 = sphi 0, %s136
      %s138 = sphi 0, %s136
      %s139 = sphi 0, %s138
      %s153 = sphi 0, %s139
      %s157 = sphi 0, %s157
      %s159 = sphi 0, %s157
      %s160 = sphi 0, %s159
      %s174 = sphi 0, %s160
      %s178 = sphi 0, %s178
      %s180 = sphi 0, %s178
      %s181 = sphi 0, %s180
      %s195 = sphi 0, %s181
      %s201 = sphi 0, %s203
      %s204 = sphi 0, %s201
      %s205 = sphi 0, %s204
      %s221 = sphi 0, %s205
      %s227 = sphi 0, %s229
      %s230 = sphi 0, %s227
      %s231 = sphi 0, %s230
      %s247 = sphi 0, %s231
      %s253 = sphi 0, %s255
      %s256 = sphi 0, %s253
      %s257 = sphi 0, %s256
      %s273 = sphi 0, %s257
    $region4: #{tpu_custom_call.1} parent=1 // loop_header_branch
      %32 = sbr.rel (%p30) target = $region8
    $region5: #{tpu_custom_call.1} parent=1 // loop_body
      %s34 = ssub.s32 %s29, 1
      %s35 = ssub.s32 %s29, 2
      %s36 = sadd.s32 %s29, 1
      %s37 = ssub.s32 %s29, %s36
      %p38 = scmp.eq.s32.totalorder %s37, 0
      %s40 = sadd.s32 %s39, 1
      %s41 = scalar_select %p38, %s39, %s40
      %p44 = pneg %p38
      %p45 = scmp.eq.s32.totalorder %s29, 1
      %p46 = por %p44, %p45
      %p47 = scmp.ne.s32.totalorder %s39, %s42
      %p48 = scmp.eq.s32.totalorder %s29, 0
      %p49 = por %p47, %p48
      %p50 = scmp.ne.s32.totalorder %s39, %s42
      %p51 = scmp.eq.s32.totalorder %s34, 1
      %p52 = por %p50, %p51
      %p53 = scmp.ne.s32.totalorder %s42, %s43
      %p54 = scmp.eq.s32.totalorder %s34, 0
      %p55 = por %p53, %p54
      %p56 = scmp.ne.s32.totalorder %s42, %s43
      %p57 = scmp.eq.s32.totalorder %s35, 1
      %p58 = por %p56, %p57
      %p60 = scmp.ne.s32.totalorder %s43, %s59
      %p61 = scmp.eq.s32.totalorder %s35, 0
      %p62 = por %p60, %p61
      %s63 = ssub.s32 %s29, %s36
      %p64 = scmp.eq.s32.totalorder %s63, 0
      %s66 = sadd.s32 %s65, 1
      %s67 = scalar_select %p64, %s65, %s66
      %p70 = pneg %p64
      %p71 = scmp.eq.s32.totalorder %s29, 1
      %p72 = por %p70, %p71
      %p73 = scmp.ne.s32.totalorder %s65, %s68
      %p74 = scmp.eq.s32.totalorder %s29, 0
      %p75 = por %p73, %p74
      %p76 = scmp.ne.s32.totalorder %s65, %s68
      %p77 = scmp.eq.s32.totalorder %s34, 1
      %p78 = por %p76, %p77
      %p79 = scmp.ne.s32.totalorder %s68, %s69
      %p80 = scmp.eq.s32.totalorder %s34, 0
      %p81 = por %p79, %p80
      %p82 = scmp.ne.s32.totalorder %s68, %s69
      %p83 = scmp.eq.s32.totalorder %s35, 1
      %p84 = por %p82, %p83
      %p86 = scmp.ne.s32.totalorder %s69, %s85
      %p87 = scmp.eq.s32.totalorder %s35, 0
      %p88 = por %p86, %p87
      %s89 = ssub.s32 %s29, %s36
      %p90 = scmp.eq.s32.totalorder %s89, 0
      %s92 = sadd.s32 %s91, 1
      %s93 = scalar_select %p90, %s91, %s92
      %p96 = pneg %p90
      %p97 = scmp.eq.s32.totalorder %s29, 1
      %p98 = por %p96, %p97
      %p99 = scmp.ne.s32.totalorder %s91, %s94
      %p100 = scmp.eq.s32.totalorder %s29, 0
      %p101 = por %p99, %p100
      %p102 = scmp.ne.s32.totalorder %s91, %s94
      %p103 = scmp.eq.s32.totalorder %s34, 1
      %p104 = por %p102, %p103
      %p105 = scmp.ne.s32.totalorder %s94, %s95
      %p106 = scmp.eq.s32.totalorder %s34, 0
      %p107 = por %p105, %p106
      %p108 = scmp.ne.s32.totalorder %s94, %s95
      %p109 = scmp.eq.s32.totalorder %s35, 1
      %p110 = por %p108, %p109
      %p112 = scmp.ne.s32.totalorder %s95, %s111
      %p113 = scmp.eq.s32.totalorder %s35, 0
      %p114 = por %p112, %p113
      %s116 = sadd.s32 %s115, 1
      %p119 = scmp.eq.s32.totalorder %s29, 1
      %p120 = scmp.ne.s32.totalorder %s115, %s117
      %p121 = scmp.eq.s32.totalorder %s29, 0
      %p122 = por %p120, %p121
      %p123 = scmp.ne.s32.totalorder %s115, %s117
      %p124 = scmp.eq.s32.totalorder %s34, 1
      %p125 = por %p123, %p124
      %p126 = scmp.ne.s32.totalorder %s117, %s118
      %p127 = scmp.eq.s32.totalorder %s34, 0
      %p128 = por %p126, %p127
      %p129 = scmp.ne.s32.totalorder %s117, %s118
      %p130 = scmp.eq.s32.totalorder %s35, 1
      %p131 = por %p129, %p130
      %p133 = scmp.ne.s32.totalorder %s118, %s132
      %p134 = scmp.eq.s32.totalorder %s35, 0
      %p135 = por %p133, %p134
      %s137 = sadd.s32 %s136, 1
      %p140 = scmp.eq.s32.totalorder %s29, 1
      %p141 = scmp.ne.s32.totalorder %s136, %s138
      %p142 = scmp.eq.s32.totalorder %s29, 0
      %p143 = por %p141, %p142
      %p144 = scmp.ne.s32.totalorder %s136, %s138
      %p145 = scmp.eq.s32.totalorder %s34, 1
      %p146 = por %p144, %p145
      %p147 = scmp.ne.s32.totalorder %s138, %s139
      %p148 = scmp.eq.s32.totalorder %s34, 0
      %p149 = por %p147, %p148
      %p150 = scmp.ne.s32.totalorder %s138, %s139
      %p151 = scmp.eq.s32.totalorder %s35, 1
      %p152 = por %p150, %p151
      %p154 = scmp.ne.s32.totalorder %s139, %s153
      %p155 = scmp.eq.s32.totalorder %s35, 0
      %p156 = por %p154, %p155
      %s158 = sadd.s32 %s157, 1
      %p161 = scmp.eq.s32.totalorder %s29, 1
      %p162 = scmp.ne.s32.totalorder %s157, %s159
      %p163 = scmp.eq.s32.totalorder %s29, 0
      %p164 = por %p162, %p163
      %p165 = scmp.ne.s32.totalorder %s157, %s159
      %p166 = scmp.eq.s32.totalorder %s34, 1
      %p167 = por %p165, %p166
      %p168 = scmp.ne.s32.totalorder %s159, %s160
      %p169 = scmp.eq.s32.totalorder %s34, 0
      %p170 = por %p168, %p169
      %p171 = scmp.ne.s32.totalorder %s159, %s160
      %p172 = scmp.eq.s32.totalorder %s35, 1
      %p173 = por %p171, %p172
      %p175 = scmp.ne.s32.totalorder %s160, %s174
      %p176 = scmp.eq.s32.totalorder %s35, 0
      %p177 = por %p175, %p176
      %s179 = sadd.s32 %s178, 1
      %p182 = scmp.eq.s32.totalorder %s29, 1
      %p183 = scmp.ne.s32.totalorder %s178, %s180
      %p184 = scmp.eq.s32.totalorder %s29, 0
      %p185 = por %p183, %p184
      %p186 = scmp.ne.s32.totalorder %s178, %s180
      %p187 = scmp.eq.s32.totalorder %s34, 1
      %p188 = por %p186, %p187
      %p189 = scmp.ne.s32.totalorder %s180, %s181
      %p190 = scmp.eq.s32.totalorder %s34, 0
      %p191 = por %p189, %p190
      %p192 = scmp.ne.s32.totalorder %s180, %s181
      %p193 = scmp.eq.s32.totalorder %s35, 1
      %p194 = por %p192, %p193
      %p196 = scmp.ne.s32.totalorder %s181, %s195
      %p197 = scmp.eq.s32.totalorder %s35, 0
      %p198 = por %p196, %p197
      %s199 = ssub.s32 %s29, %s36
      %p200 = scmp.eq.s32.totalorder %s199, 0
      %s202 = sadd.s32 %s201, 1
      %s203 = scalar_select %p200, %s201, %s202
      %p206 = pneg %p200
      %p207 = scmp.eq.s32.totalorder %s29, 1
      %p208 = por %p206, %p207
      %p209 = scmp.ne.s32.totalorder %s201, %s204
      %p210 = scmp.eq.s32.totalorder %s29, 0
      %p211 = por %p209, %p210
      %p212 = scmp.ne.s32.totalorder %s201, %s204
      %p213 = scmp.eq.s32.totalorder %s34, 1
      %p214 = por %p212, %p213
      %p215 = scmp.ne.s32.totalorder %s204, %s205
      %p216 = scmp.eq.s32.totalorder %s34, 0
      %p217 = por %p215, %p216
      %p218 = scmp.ne.s32.totalorder %s204, %s205
      %p219 = scmp.eq.s32.totalorder %s35, 1
      %p220 = por %p218, %p219
      %p222 = scmp.ne.s32.totalorder %s205, %s221
      %p223 = scmp.eq.s32.totalorder %s35, 0
      %p224 = por %p222, %p223
      %s225 = ssub.s32 %s29, %s36
      %p226 = scmp.eq.s32.totalorder %s225, 0
      %s228 = sadd.s32 %s227, 1
      %s229 = scalar_select %p226, %s227, %s228
      %p232 = pneg %p226
      %p233 = scmp.eq.s32.totalorder %s29, 1
      %p234 = por %p232, %p233
      %p235 = scmp.ne.s32.totalorder %s227, %s230
      %p236 = scmp.eq.s32.totalorder %s29, 0
      %p237 = por %p235, %p236
      %p238 = scmp.ne.s32.totalorder %s227, %s230
      %p239 = scmp.eq.s32.totalorder %s34, 1
      %p240 = por %p238, %p239
      %p241 = scmp.ne.s32.totalorder %s230, %s231
      %p242 = scmp.eq.s32.totalorder %s34, 0
      %p243 = por %p241, %p242
      %p244 = scmp.ne.s32.totalorder %s230, %s231
      %p245 = scmp.eq.s32.totalorder %s35, 1
      %p246 = por %p244, %p245
      %p248 = scmp.ne.s32.totalorder %s231, %s247
      %p249 = scmp.eq.s32.totalorder %s35, 0
      %p250 = por %p248, %p249
      %s251 = ssub.s32 %s29, %s36
      %p252 = scmp.eq.s32.totalorder %s251, 0
      %s254 = sadd.s32 %s253, 1
      %s255 = scalar_select %p252, %s253, %s254
      %p258 = pneg %p252
      %p259 = scmp.eq.s32.totalorder %s29, 1
      %p260 = por %p258, %p259
      %p261 = scmp.ne.s32.totalorder %s253, %s256
      %p262 = scmp.eq.s32.totalorder %s29, 0
      %p263 = por %p261, %p262
      %p264 = scmp.ne.s32.totalorder %s253, %s256
      %p265 = scmp.eq.s32.totalorder %s34, 1
      %p266 = por %p264, %p265
      %p267 = scmp.ne.s32.totalorder %s256, %s257
      %p268 = scmp.eq.s32.totalorder %s34, 0
      %p269 = por %p267, %p268
      %p270 = scmp.ne.s32.totalorder %s256, %s257
      %p271 = scmp.eq.s32.totalorder %s35, 1
      %p272 = por %p270, %p271
      %p274 = scmp.ne.s32.totalorder %s257, %s273
      %p275 = scmp.eq.s32.totalorder %s35, 0
      %p276 = por %p274, %p275
      %p277 = scmp.le.s32.totalorder 1, %s29
      %p278 = scmp.lt.s32.totalorder %s29, 3
      %p279 = pnand %p277, %p278
      %p280 = pneg %p279
      // Predicated region
      $region9: #{tpu_custom_call.1} parent=5 // pred_check
        _
      $region10: #{tpu_custom_call.1} parent=5 // pred_check_branch
        %282 = sbr.rel (%p279) target = $region12
      $region11: #{tpu_custom_call.1} parent=5 // pred_region
        %s283 = ssub.s32 %s29, 1
        // Predicated region
        $region13: #{tpu_custom_call.1} parent=11 // pred_check
          %p284 = pneg %p128
        $region14: #{tpu_custom_call.1} parent=11 // pred_check_branch
          %286 = sbr.rel (%p284) target = $region16
        $region15: #{tpu_custom_call.1} parent=11 // pred_region
          %s288 = ssub.s32 512, 512
          %289 = vsyncadd [#allocation9], %s288
          %s290 = sshll.u32 [#allocation8], 4
          %s291 = int_to_ptr.vmem [resolvable:$true] %s290
          %296 = dma.hbm_to_vmem [thread:$0]  %s3, 512, %s291, [#allocation9], 128, 128, 8
        $region16: #{tpu_custom_call.1} parent=11 // pred_fallthru
          _
        // Predicated region
        $region17: #{tpu_custom_call.1} parent=11 // pred_check
          %p297 = pneg %p149
        $region18: #{tpu_custom_call.1} parent=11 // pred_check_branch
          %299 = sbr.rel (%p297) target = $region20
        $region19: #{tpu_custom_call.1} parent=11 // pred_region
          _
        $region20: #{tpu_custom_call.1} parent=11 // pred_fallthru
          _
        // Predicated region
        $region21: #{tpu_custom_call.1} parent=11 // pred_check
          %p300 = pneg %p170
        $region22: #{tpu_custom_call.1} parent=11 // pred_check_branch
          %302 = sbr.rel (%p300) target = $region24
        $region23: #{tpu_custom_call.1} parent=11 // pred_region
          %s304 = ssub.s32 512, 512
          %305 = vsyncadd [#allocation9], %s304
          %s306 = sshll.u32 [#allocation10], 4
          %s307 = int_to_ptr.vmem [resolvable:$true] %s306
          %312 = dma.hbm_to_vmem [thread:$0]  %s5, 512, %s307, [#allocation9], 128, 128, 8
        $region24: #{tpu_custom_call.1} parent=11 // pred_fallthru
          _
        // Predicated region
        $region25: #{tpu_custom_call.1} parent=11 // pred_check
          %p313 = pneg %p191
        $region26: #{tpu_custom_call.1} parent=11 // pred_check_branch
          %315 = sbr.rel (%p313) target = $region28
        $region27: #{tpu_custom_call.1} parent=11 // pred_region
          _
        $region28: #{tpu_custom_call.1} parent=11 // pred_fallthru
          _
      $region12: #{tpu_custom_call.1} parent=5 // pred_fallthru
        _
      %p316 = scmp.lt.s32.totalorder %s29, 2
      // Predicated region
      $region29: #{tpu_custom_call.1} parent=5 // pred_check
        %p317 = pneg %p316
      $region30: #{tpu_custom_call.1} parent=5 // pred_check_branch
        %319 = sbr.rel (%p317) target = $region32
      $region31: #{tpu_custom_call.1} parent=5 // pred_region
        // Predicated region
        $region33: #{tpu_custom_call.1} parent=31 // pred_check
          %p320 = pneg %p49
        $region34: #{tpu_custom_call.1} parent=31 // pred_check_branch
          %322 = sbr.rel (%p320) target = $region36
        $region35: #{tpu_custom_call.1} parent=31 // pred_region
          %s323 = sand.u32 %s39, 1
          %s324 = scalar_lea.sflag [#allocation3], %s323
          %s325 = sand.u32 %s39, 1
          %s326 = smul.addr %s325, 8
          %s327 = scalar_lea.vmem [#allocation2], %s326
          %s329 = ssub.s32 128, 128
          %330 = vsyncadd %s324, %s329
          %s331 = smul.addr %s29, 128
          %s332 = scalar_lea.hbm %s0, %s331
          %s334 = sshll.u32 %s327, 4
          %s335 = int_to_ptr.vmem [resolvable:$true] %s334
          %337 = dma.hbm_to_vmem [thread:$0]  %s332, 128, %s335, %s324
        $region36: #{tpu_custom_call.1} parent=31 // pred_fallthru
          _
        // Predicated region
        $region37: #{tpu_custom_call.1} parent=31 // pred_check
          %p338 = pneg %p75
        $region38: #{tpu_custom_call.1} parent=31 // pred_check_branch
          %340 = sbr.rel (%p338) target = $region40
        $region39: #{tpu_custom_call.1} parent=31 // pred_region
          %s341 = sand.u32 %s29, 1
          %s342 = scalar_lea.sflag [#allocation6], %s341
          %s343 = sand.u32 %s65, 1
          %s344 = smul.addr %s343, 8
          %s345 = scalar_lea.vmem [#allocation5], %s344
          %s347 = ssub.s32 128, 128
          %348 = vsyncadd %s342, %s347
          %s349 = smul.addr %s29, 128
          %s350 = scalar_lea.hbm %s1, %s349
          %s352 = sshll.u32 %s345, 4
          %s353 = int_to_ptr.vmem [resolvable:$true] %s352
          %355 = dma.hbm_to_vmem [thread:$0]  %s350, 128, %s353, %s342
        $region40: #{tpu_custom_call.1} parent=31 // pred_fallthru
          _
        // Predicated region
        $region41: #{tpu_custom_call.1} parent=31 // pred_check
          %p356 = pneg %p101
        $region42: #{tpu_custom_call.1} parent=31 // pred_check_branch
          %358 = sbr.rel (%p356) target = $region44
        $region43: #{tpu_custom_call.1} parent=31 // pred_region
          %s359 = sand.u32 %s29, 1
          %s360 = scalar_lea.sflag [#allocation6], %s359
          %s361 = sand.u32 %s91, 1
          %s362 = smul.addr %s361, 8
          %s363 = scalar_lea.vmem [#allocation7], %s362
          %s365 = ssub.s32 128, 128
          %366 = vsyncadd %s360, %s365
          %s367 = smul.addr %s29, 128
          %s368 = scalar_lea.hbm %s2, %s367
          %s370 = sshll.u32 %s363, 4
          %s371 = int_to_ptr.vmem [resolvable:$true] %s370
          %373 = dma.hbm_to_vmem [thread:$0]  %s368, 128, %s371, %s360
        $region44: #{tpu_custom_call.1} parent=31 // pred_fallthru
          _
      $region32: #{tpu_custom_call.1} parent=5 // pred_fallthru
        _
      %p374 = scmp.le.s32.totalorder 1, %s29
      %p375 = scmp.lt.s32.totalorder %s29, 3
      %p376 = pnand %p374, %p375
      %p377 = pneg %p376
      // Predicated region
      $region45: #{tpu_custom_call.1} parent=5 // pred_check
        _
      $region46: #{tpu_custom_call.1} parent=5 // pred_check_branch
        %379 = sbr.rel (%p376) target = $region48
      $region47: #{tpu_custom_call.1} parent=5 // pred_region
        %s380 = ssub.s32 %s29, 1
        %s381 = sand.u32 %s42, 1
        %s382 = scalar_lea.sflag [#allocation3], %s381
        %s383 = sand.u32 %s42, 1
        %s384 = smul.addr %s383, 8
        %s385 = scalar_lea.vmem [#allocation2], %s384
        // Predicated region
        $region49: #{tpu_custom_call.1} parent=47 // pred_check
          %p386 = pneg %p55
        $region50: #{tpu_custom_call.1} parent=47 // pred_check_branch
          %388 = sbr.rel (%p386) target = $region52
        $region51: #{tpu_custom_call.1} parent=47 // pred_region
          %389 = dma.done %s382, 128
        $region52: #{tpu_custom_call.1} parent=47 // pred_fallthru
          _
        %s390 = sand.u32 %s34, 1
        %s391 = scalar_lea.sflag [#allocation6], %s390
        %s392 = sand.u32 %s68, 1
        %s393 = smul.addr %s392, 8
        %s394 = scalar_lea.vmem [#allocation5], %s393
        // Predicated region
        $region53: #{tpu_custom_call.1} parent=47 // pred_check
          %p395 = pneg %p81
        $region54: #{tpu_custom_call.1} parent=47 // pred_check_branch
          %397 = sbr.rel (%p395) target = $region56
        $region55: #{tpu_custom_call.1} parent=47 // pred_region
          %398 = dma.done %s391, 128
        $region56: #{tpu_custom_call.1} parent=47 // pred_fallthru
          _
        %s399 = sand.u32 %s34, 1
        %s400 = scalar_lea.sflag [#allocation6], %s399
        %s401 = sand.u32 %s94, 1
        %s402 = smul.addr %s401, 8
        %s403 = scalar_lea.vmem [#allocation7], %s402
        // Predicated region
        $region57: #{tpu_custom_call.1} parent=47 // pred_check
          %p404 = pneg %p107
        $region58: #{tpu_custom_call.1} parent=47 // pred_check_branch
          %406 = sbr.rel (%p404) target = $region60
        $region59: #{tpu_custom_call.1} parent=47 // pred_region
          %407 = dma.done %s400, 128
        $region60: #{tpu_custom_call.1} parent=47 // pred_fallthru
          _
        // Predicated region
        $region61: #{tpu_custom_call.1} parent=47 // pred_check
          %p408 = pneg %p128
        $region62: #{tpu_custom_call.1} parent=47 // pred_check_branch
          %410 = sbr.rel (%p408) target = $region64
        $region63: #{tpu_custom_call.1} parent=47 // pred_region
          %411 = dma.done [#allocation9], 512
        $region64: #{tpu_custom_call.1} parent=47 // pred_fallthru
          _
        // Predicated region
        $region65: #{tpu_custom_call.1} parent=47 // pred_check
          %p412 = pneg %p170
        $region66: #{tpu_custom_call.1} parent=47 // pred_check_branch
          %414 = sbr.rel (%p412) target = $region68
        $region67: #{tpu_custom_call.1} parent=47 // pred_region
          %415 = dma.done [#allocation9], 512
        $region68: #{tpu_custom_call.1} parent=47 // pred_fallthru
          _
        %s416 = sand.u32 %s42, 1
        %s417 = scalar_lea.sflag [#allocation3], %s416
        %s418 = sand.u32 %s42, 1
        %s419 = smul.addr %s418, 8
        %s420 = scalar_lea.vmem [#allocation2], %s419
        %p421 = pneg %p55
        %p422 = pneg %p52
        %s423 = sand.u32 %s34, 1
        %s424 = scalar_lea.sflag [#allocation6], %s423
        %s425 = sand.u32 %s68, 1
        %s426 = smul.addr %s425, 8
        %s427 = scalar_lea.vmem [#allocation5], %s426
        %p428 = pneg %p81
        %p429 = pneg %p78
        %s430 = sand.u32 %s34, 1
        %s431 = scalar_lea.sflag [#allocation6], %s430
        %s432 = sand.u32 %s94, 1
        %s433 = smul.addr %s432, 8
        %s434 = scalar_lea.vmem [#allocation7], %s433
        %p435 = pneg %p107
        %p436 = pneg %p104
        %p437 = pneg %p128
        %p438 = pneg %p125
        %p439 = pneg %p149
        %p440 = pneg %p146
        %p441 = pneg %p170
        %p442 = pneg %p167
        %p443 = pneg %p191
        %p444 = pneg %p188
        %p445 = pneg %p217
        %p446 = pneg %p214
        %s447 = sand.u32 %s204, 1
        %s448 = scalar_lea.sflag [#allocation4], %s447
        %s449 = sand.u32 %s204, 1
        %s450 = smul.addr %s449, 16
        %s451 = scalar_lea.vmem [#allocation11], %s450
        %p452 = pneg %p243
        %p453 = pneg %p240
        %s454 = sand.u32 %s34, 1
        %s455 = scalar_lea.sflag [#allocation13], %s454
        %s456 = sand.u32 %s230, 1
        %s457 = smul.addr %s456, 16
        %s458 = scalar_lea.vmem [#allocation12], %s457
        %p459 = pneg %p269
        %p460 = pneg %p266
        %s461 = sand.u32 %s34, 1
        %s462 = scalar_lea.sflag [#allocation13], %s461
        %s463 = sand.u32 %s256, 1
        %s464 = smul.addr %s463, 16
        %s465 = scalar_lea.vmem [#allocation14], %s464
        %v467 = vld [vmem:[#allocation8] sm:$0xff]
        %v468 = vld [vmem:[#allocation8 + $0x8] sm:$0xff]
        %v469 = vld [vmem:[#allocation8 + $0x10] sm:$0xff]
        %v470 = vld [vmem:[#allocation8 + $0x18] sm:$0xff]
        %v471 = vpack.c.bf16 %v468, %v467
        %v472 = vpack.c.bf16 %v470, %v469
        %v473 = vld [vmem:[#allocation10] sm:$0xff]
        %v474 = vld [vmem:[#allocation10 + $0x8] sm:$0xff]
        %v475 = vld [vmem:[#allocation10 + $0x10] sm:$0xff]
        %v476 = vld [vmem:[#allocation10 + $0x18] sm:$0xff]
        %v477 = vpack.c.bf16 %v474, %v473
        %v478 = vpack.c.bf16 %v476, %v475
        %v479 = vld [vmem:[%s4] sm:$0x1]
        %v480 = vld [vmem:[%s6] sm:$0x1]
        %v481 = vld [vmem:[%s385] sm:$0xff]
        %v482 = vpack.c.bf16 %v481, %v481
        %v484 = vlaneseq
        %v485 = vshrl.u32 %v484, 7
        %v486 = vsub.s32 0, %v485
        %v487 = vrot.slane %v479, %v486
        %vm489 = vcmask 261120
        %v491 = vsel %vm489, %v482, 0
        %493 = vmatprep.subr.bf16.mxu0 0
        %494 = vmatpush1.bf16.msra.mxu0 %v471
        %495 = vmatprep.subr.bf16.mxu0 0
        %496 = vmatpush1.bf16.msra.mxu0 %v472
        %497 = vmatprep.subr.bf16.mxu0 0
        %498 = vmatpush1.bf16.msra.mxu0 0
        %499 = vmatprep.subr.bf16.mxu0 0
        %500 = vmatpush1.bf16.msra.mxu0 0
        %501 = vmatprep.subr.bf16.mxu0 0
        %502 = vmatpush1.bf16.msra.mxu0 0
        %503 = vmatprep.subr.bf16.mxu0 0
        %504 = vmatpush1.bf16.msra.mxu0 0
        %505 = vmatprep.subr.bf16.mxu0 0
        %506 = vmatpush1.bf16.msra.mxu0 0
        %507 = vmatprep.subr.bf16.mxu0 0
        %508 = vmatpush1.bf16.msra.mxu0 0
        %509 = vmatprep.subr.bf16.mxu0 0
        %510 = vmatpush1.bf16.msra.mxu0 0
        %511 = vmatprep.subr.bf16.mxu0 0
        %512 = vmatpush1.bf16.msra.mxu0 0
        %513 = vmatprep.subr.bf16.mxu0 0
        %514 = vmatpush1.bf16.msra.mxu0 0
        %515 = vmatprep.subr.bf16.mxu0 0
        %516 = vmatpush1.bf16.msra.mxu0 0
        %517 = vmatprep.subr.bf16.mxu0 0
        %518 = vmatpush1.bf16.msra.mxu0 0
        %519 = vmatprep.subr.bf16.mxu0 0
        %520 = vmatpush1.bf16.msra.mxu0 0
        %521 = vmatprep.subr.bf16.mxu0 0
        %522 = vmatpush1.bf16.msra.mxu0 0
        %523 = vmatprep.subr.bf16.mxu0 0
        %524 = vmatpush1.bf16.msra.mxu0 0
        %525 = vmatprep.mubr.bf16.mxu0 0
        %526 = vmatmul.mubr.bf16.gmra.mrb[0].mxu0 %v491
        %v527 = vpop.f32.mrb[0].mxu0
        %v528 = vadd.f32 %v487, %v527
        %v529 = vpop.f32.mrb[0].mxu0
        %v530 = vpop.f32.mrb[0].mxu0
        %v531 = vpop.f32.mrb[0].mxu0
        %532 = vdwg.mxu0
        %v533 = vld [vmem:[%s394] sm:$0xff]
        %v534 = vpack.c.bf16 %v533, %v533
        %v536 = vsel %vm489, %v534, 0
        %538 = vmatprep.subr.bf16.mxu0 0
        %539 = vmatpush1.bf16.msra.mxu0 %v471
        %540 = vmatprep.subr.bf16.mxu0 0
        %541 = vmatpush1.bf16.msra.mxu0 %v472
        %542 = vmatprep.subr.bf16.mxu0 0
        %543 = vmatpush1.bf16.msra.mxu0 0
        %544 = vmatprep.subr.bf16.mxu0 0
        %545 = vmatpush1.bf16.msra.mxu0 0
        %546 = vmatprep.subr.bf16.mxu0 0
        %547 = vmatpush1.bf16.msra.mxu0 0
        %548 = vmatprep.subr.bf16.mxu0 0
        %549 = vmatpush1.bf16.msra.mxu0 0
        %550 = vmatprep.subr.bf16.mxu0 0
        %551 = vmatpush1.bf16.msra.mxu0 0
        %552 = vmatprep.subr.bf16.mxu0 0
        %553 = vmatpush1.bf16.msra.mxu0 0
        %554 = vmatprep.subr.bf16.mxu0 0
        %555 = vmatpush1.bf16.msra.mxu0 0
        %556 = vmatprep.subr.bf16.mxu0 0
        %557 = vmatpush1.bf16.msra.mxu0 0
        %558 = vmatprep.subr.bf16.mxu0 0
        %559 = vmatpush1.bf16.msra.mxu0 0
        %560 = vmatprep.subr.bf16.mxu0 0
        %561 = vmatpush1.bf16.msra.mxu0 0
        %562 = vmatprep.subr.bf16.mxu0 0
        %563 = vmatpush1.bf16.msra.mxu0 0
        %564 = vmatprep.subr.bf16.mxu0 0
        %565 = vmatpush1.bf16.msra.mxu0 0
        %566 = vmatprep.subr.bf16.mxu0 0
        %567 = vmatpush1.bf16.msra.mxu0 0
        %568 = vmatprep.subr.bf16.mxu0 0
        %569 = vmatpush1.bf16.msra.mxu0 0
        %570 = vmatprep.mubr.bf16.mxu0 0
        %571 = vmatmul.mubr.bf16.gmra.mrb[0].mxu0 %v536
        %v572 = vpop.f32.mrb[0].mxu0
        %v573 = vadd.f32 %v487, %v572
        %v574 = vpop.f32.mrb[0].mxu0
        %v575 = vpop.f32.mrb[0].mxu0
        %v576 = vpop.f32.mrb[0].mxu0
        %577 = vdwg.mxu0
        %v578 = vld [vmem:[%s403] sm:$0xff]
        %v579 = vpack.c.bf16 %v578, %v578
        %v581 = vlaneseq
        %v582 = vshrl.u32 %v581, 7
        %v583 = vsub.s32 0, %v582
        %v584 = vrot.slane %v480, %v583
        %v587 = vsel %vm489, %v579, 0
        %589 = vmatprep.subr.bf16.mxu0 0
        %590 = vmatpush1.bf16.msra.mxu0 %v477
        %591 = vmatprep.subr.bf16.mxu0 0
        %592 = vmatpush1.bf16.msra.mxu0 %v478
        %593 = vmatprep.subr.bf16.mxu0 0
        %594 = vmatpush1.bf16.msra.mxu0 0
        %595 = vmatprep.subr.bf16.mxu0 0
        %596 = vmatpush1.bf16.msra.mxu0 0
        %597 = vmatprep.subr.bf16.mxu0 0
        %598 = vmatpush1.bf16.msra.mxu0 0
        %599 = vmatprep.subr.bf16.mxu0 0
        %600 = vmatpush1.bf16.msra.mxu0 0
        %601 = vmatprep.subr.bf16.mxu0 0
        %602 = vmatpush1.bf16.msra.mxu0 0
        %603 = vmatprep.subr.bf16.mxu0 0
        %604 = vmatpush1.bf16.msra.mxu0 0
        %605 = vmatprep.subr.bf16.mxu0 0
        %606 = vmatpush1.bf16.msra.mxu0 0
        %607 = vmatprep.subr.bf16.mxu0 0
        %608 = vmatpush1.bf16.msra.mxu0 0
        %609 = vmatprep.subr.bf16.mxu0 0
        %610 = vmatpush1.bf16.msra.mxu0 0
        %611 = vmatprep.subr.bf16.mxu0 0
        %612 = vmatpush1.bf16.msra.mxu0 0
        %613 = vmatprep.subr.bf16.mxu0 0
        %614 = vmatpush1.bf16.msra.mxu0 0
        %615 = vmatprep.subr.bf16.mxu0 0
        %616 = vmatpush1.bf16.msra.mxu0 0
        %617 = vmatprep.subr.bf16.mxu0 0
        %618 = vmatpush1.bf16.msra.mxu0 0
        %619 = vmatprep.subr.bf16.mxu0 0
        %620 = vmatpush1.bf16.msra.mxu0 0
        %621 = vmatprep.mubr.bf16.mxu0 0
        %622 = vmatmul.mubr.bf16.gmra.mrb[0].mxu0 %v587
        %v623 = vpop.f32.mrb[0].mxu0
        %v624 = vadd.f32 %v584, %v623
        %v625 = vpop.f32.mrb[0].mxu0
        %v626 = vpop.f32.mrb[0].mxu0
        %v627 = vpop.f32.mrb[0].mxu0
        %628 = vdwg.mxu0
        %v629 = vpack.c.bf16 %v528, %v528
        %vm630 = vcmask 60416
        %631 = vst.msk [vmem:[%s451] sm:$0xf] %vm630, %v629
        %v632 = vpack.c.bf16 %v573, %v573
        %633 = vst.msk [vmem:[%s458] sm:$0xf] %vm630, %v632
        %v634 = vpack.c.bf16 %v624, %v624
        %635 = vst.msk [vmem:[%s465] sm:$0xf] %vm630, %v634
        %v637 = vunpack.c.l.b16 %v629
        %v638 = vpack.c.b16 %v637, %v637
        %639 = vrot.lane.b32.xlu0 %v638, 120
        %v640 = vpop.permute.xlu0 %639
        %s642 = scalar_lea.vmem %s451, 4 [#allocation11]
        %643 = vst.msk [vmem:[%s642] sm:$0xf] %vm630, %v640
        %v645 = vunpack.c.l.b16 %v632
        %v646 = vpack.c.b16 %v645, %v645
        %647 = vrot.lane.b32.xlu0 %v646, 120
        %v648 = vpop.permute.xlu0 %647
        %s650 = scalar_lea.vmem %s458, 4 [#allocation12]
        %651 = vst.msk [vmem:[%s650] sm:$0xf] %vm630, %v648
        %v653 = vunpack.c.l.b16 %v634
        %v654 = vpack.c.b16 %v653, %v653
        %655 = vrot.lane.b32.xlu0 %v654, 120
        %v656 = vpop.permute.xlu0 %655
        %s658 = scalar_lea.vmem %s465, 4 [#allocation14]
        %659 = vst.msk [vmem:[%s658] sm:$0xf] %vm630, %v656
        %660 = vrot.lane.b32.xlu0 %v638, 112
        %v661 = vpop.permute.xlu0 %660
        %s663 = scalar_lea.vmem %s451, 8 [#allocation11]
        %664 = vst.msk [vmem:[%s663] sm:$0xf] %vm630, %v661
        %665 = vrot.lane.b32.xlu0 %v646, 112
        %v666 = vpop.permute.xlu0 %665
        %s668 = scalar_lea.vmem %s458, 8 [#allocation12]
        %669 = vst.msk [vmem:[%s668] sm:$0xf] %vm630, %v666
        %670 = vrot.lane.b32.xlu0 %v654, 112
        %v671 = vpop.permute.xlu0 %670
        %s673 = scalar_lea.vmem %s465, 8 [#allocation14]
        %674 = vst.msk [vmem:[%s673] sm:$0xf] %vm630, %v671
        %675 = vrot.lane.b32.xlu0 %v638, 104
        %v676 = vpop.permute.xlu0 %675
        %s678 = scalar_lea.vmem %s451, 12 [#allocation11]
        %679 = vst.msk [vmem:[%s678] sm:$0xf] %vm630, %v676
        %680 = vrot.lane.b32.xlu0 %v646, 104
        %v681 = vpop.permute.xlu0 %680
        %s683 = scalar_lea.vmem %s458, 12 [#allocation12]
        %684 = vst.msk [vmem:[%s683] sm:$0xf] %vm630, %v681
        %685 = vrot.lane.b32.xlu0 %v654, 104
        %v686 = vpop.permute.xlu0 %685
        %s688 = scalar_lea.vmem %s465, 12 [#allocation14]
        %689 = vst.msk [vmem:[%s688] sm:$0xf] %vm630, %v686
        %s690 = sand.u32 %s204, 1
        %s691 = scalar_lea.sflag [#allocation4], %s690
        %s692 = sand.u32 %s204, 1
        %s693 = smul.addr %s692, 16
        %s694 = scalar_lea.vmem [#allocation11], %s693
        %s695 = sand.u32 %s34, 1
        %s696 = scalar_lea.sflag [#allocation13], %s695
        %s697 = sand.u32 %s230, 1
        %s698 = smul.addr %s697, 16
        %s699 = scalar_lea.vmem [#allocation12], %s698
        %s700 = sand.u32 %s34, 1
        %s701 = scalar_lea.sflag [#allocation13], %s700
        %s702 = sand.u32 %s256, 1
        %s703 = smul.addr %s702, 16
        %s704 = scalar_lea.vmem [#allocation14], %s703
        // Predicated region
        $region69: #{tpu_custom_call.1} parent=47 // pred_check
          %p705 = pneg %p214
        $region70: #{tpu_custom_call.1} parent=47 // pred_check_branch
          %707 = sbr.rel (%p705) target = $region72
        $region71: #{tpu_custom_call.1} parent=47 // pred_region
          %s709 = ssub.s32 256, 256
          %710 = vsyncadd %s691, %s709
          %s711 = smul.addr %s34, 4
          %s712 = smul.addr %s711, 64
          %s713 = scalar_lea.hbm %s7, %s712
          %s714 = sshll.u32 %s694, 4
          %s715 = int_to_ptr.vmem [resolvable:$true] %s714
          %720 = dma.vmem_to_hbm [thread:$0]  %s715, 256, %s713, %s691, 64, 64, 4
        $region72: #{tpu_custom_call.1} parent=47 // pred_fallthru
          _
        // Predicated region
        $region73: #{tpu_custom_call.1} parent=47 // pred_check
          %p721 = pneg %p240
        $region74: #{tpu_custom_call.1} parent=47 // pred_check_branch
          %723 = sbr.rel (%p721) target = $region76
        $region75: #{tpu_custom_call.1} parent=47 // pred_region
          %s725 = ssub.s32 256, 256
          %726 = vsyncadd %s696, %s725
          %s727 = smul.addr %s34, 4
          %s728 = smul.addr %s727, 64
          %s729 = scalar_lea.hbm %s8, %s728
          %s730 = sshll.u32 %s699, 4
          %s731 = int_to_ptr.vmem [resolvable:$true] %s730
          %736 = dma.vmem_to_hbm [thread:$0]  %s731, 256, %s729, %s696, 64, 64, 4
        $region76: #{tpu_custom_call.1} parent=47 // pred_fallthru
          _
        // Predicated region
        $region77: #{tpu_custom_call.1} parent=47 // pred_check
          %p737 = pneg %p266
        $region78: #{tpu_custom_call.1} parent=47 // pred_check_branch
          %739 = sbr.rel (%p737) target = $region80
        $region79: #{tpu_custom_call.1} parent=47 // pred_region
          %s741 = ssub.s32 256, 256
          %742 = vsyncadd %s701, %s741
          %s743 = smul.addr %s34, 4
          %s744 = smul.addr %s743, 64
          %s745 = scalar_lea.hbm %s9, %s744
          %s746 = sshll.u32 %s704, 4
          %s747 = int_to_ptr.vmem [resolvable:$true] %s746
          %752 = dma.vmem_to_hbm [thread:$0]  %s747, 256, %s745, %s701, 64, 64, 4
        $region80: #{tpu_custom_call.1} parent=47 // pred_fallthru
          _
      $region48: #{tpu_custom_call.1} parent=5 // pred_fallthru
        _
      %p753 = scmp.le.s32.totalorder 2, %s29
      // Predicated region
      $region81: #{tpu_custom_call.1} parent=5 // pred_check
        %p754 = pneg %p753
      $region82: #{tpu_custom_call.1} parent=5 // pred_check_branch
        %756 = sbr.rel (%p754) target = $region84
      $region83: #{tpu_custom_call.1} parent=5 // pred_region
        %s757 = ssub.s32 %s29, 2
        // Predicated region
        $region85: #{tpu_custom_call.1} parent=83 // pred_check
          %p758 = pneg %p220
        $region86: #{tpu_custom_call.1} parent=83 // pred_check_branch
          %760 = sbr.rel (%p758) target = $region88
        $region87: #{tpu_custom_call.1} parent=83 // pred_region
          %s761 = sand.u32 %s205, 1
          %s762 = scalar_lea.sflag [#allocation4], %s761
          %s763 = sand.u32 %s205, 1
          %s764 = smul.addr %s763, 16
          %s765 = scalar_lea.vmem [#allocation11], %s764
          %766 = dma.done %s762, 256
        $region88: #{tpu_custom_call.1} parent=83 // pred_fallthru
          _
        // Predicated region
        $region89: #{tpu_custom_call.1} parent=83 // pred_check
          %p767 = pneg %p246
        $region90: #{tpu_custom_call.1} parent=83 // pred_check_branch
          %769 = sbr.rel (%p767) target = $region92
        $region91: #{tpu_custom_call.1} parent=83 // pred_region
          %s770 = sand.u32 %s35, 1
          %s771 = scalar_lea.sflag [#allocation13], %s770
          %s772 = sand.u32 %s231, 1
          %s773 = smul.addr %s772, 16
          %s774 = scalar_lea.vmem [#allocation12], %s773
          %775 = dma.done %s771, 256
        $region92: #{tpu_custom_call.1} parent=83 // pred_fallthru
          _
        // Predicated region
        $region93: #{tpu_custom_call.1} parent=83 // pred_check
          %p776 = pneg %p272
        $region94: #{tpu_custom_call.1} parent=83 // pred_check_branch
          %778 = sbr.rel (%p776) target = $region96
        $region95: #{tpu_custom_call.1} parent=83 // pred_region
          %s779 = sand.u32 %s35, 1
          %s780 = scalar_lea.sflag [#allocation13], %s779
          %s781 = sand.u32 %s257, 1
          %s782 = smul.addr %s781, 16
          %s783 = scalar_lea.vmem [#allocation14], %s782
          %784 = dma.done %s780, 256
        $region96: #{tpu_custom_call.1} parent=83 // pred_fallthru
          _
      $region84: #{tpu_custom_call.1} parent=5 // pred_fallthru
        _
    $region6: #{tpu_custom_call.1} parent=1 // loop_footer
      %s33 = sadd.s32 1, %s29
    $region7: #{tpu_custom_call.1} parent=1 // loop_footer_branch
      %28 = sbr.rel target = $region3
    $region8: #{tpu_custom_call.1} parent=1 // loop_exit
      _
    %785 = vsyncpa [#allocation3], 1
    %s786 = scalar_lea.sflag [#allocation3], 1
    %787 = vsyncpa %s786, 1
    %788 = vsyncpa [#allocation6], 1
    %s789 = scalar_lea.sflag [#allocation6], 1
    %790 = vsyncpa %s789, 1
    %791 = vsyncpa [#allocation9], 1
    %792 = vsyncpa [#allocation4], 1
    %s793 = scalar_lea.sflag [#allocation4], 1
    %794 = vsyncpa %s793, 1
    %795 = vsyncpa [#allocation13], 1
    %s796 = scalar_lea.sflag [#allocation13], 1
    %797 = vsyncpa %s796, 1

</llo_original>
